<compile_context>
chip_gen: v7x
topology: tpu7x:2x2x1
jax: 0.10.0
libtpu: 0.0.40
codegen_flags: <defaults>
</compile_context>

<pallas_src>
import functools

import jax
import jax.numpy as jnp
from jax.experimental import pallas as pl
from jax.experimental.pallas import tpu as pltpu


def dwsg_kernel(x_ref, s_ref, m_ref, b1_ref, w2_ref, b2_ref, out_ref, *,
                H, WCi, WCo):
    # x_ref: (1, H, W*C_in) lane-dense tile for one batch element.
    x = x_ref[0].astype(jnp.float32)                            # (H, WCi)

    # Depthwise 3x3 conv (+ folded BN1 scale); zero-padding halo is encoded in
    # the S (row-shift) and M (lane-mixing) matrices, so no pads/slices/masks.
    acc = jnp.zeros((H, WCi), jnp.float32)
    for dy in range(3):
        shifted = jnp.dot(s_ref[dy], x,
                          preferred_element_type=jnp.float32)   # (H, WCi)
        acc = acc + jnp.dot(shifted, m_ref[dy],
                            preferred_element_type=jnp.float32)  # (H, WCi)

    # BN1 bias + ReLU (lane-dense VPU ops).
    y1 = jnp.maximum(acc + b1_ref[...], 0.0)

    # Grouped 1x1 conv (+ folded BN2 scale) as one lane-dense matmul.
    z = jnp.dot(y1, w2_ref[...], preferred_element_type=jnp.float32)
    z = jnp.maximum(z + b2_ref[...], 0.0)

    # Lane-dense (W*C_out wide) unmasked store.
    out_ref[...] = z[None].astype(out_ref.dtype)                # (1, H, WCo)


def build_dwsg_params(dw_w_pt, pw_w_pt, groups,
                      bn1_scale, bn1_bias, bn2_scale, bn2_bias, H, W):
    """One-time prep on tiny weight arrays: fold BN scales into the conv
    weights and lift both convs into the lane-merged (H, W*C) layout."""
    f32 = jnp.float32
    C_in = dw_w_pt.shape[0]
    C_out = pw_w_pt.shape[0]
    WCi, WCo = W * C_in, W * C_out

    # Depthwise taps k[dy, dx, c] with BN1 scale folded in.
    ks = jnp.transpose(dw_w_pt[:, 0, :, :], (1, 2, 0)).astype(f32)   # (3,3,C_in)
    ks = ks * bn1_scale[None, None, :]

    # Row-shift matrices (dy taps, including zero padding at h = 0 / H-1).
    S = jnp.stack([jnp.eye(H, k=dy - 1, dtype=f32) for dy in range(3)])

    # Lane-mixing matrices (dx taps, including zero padding at w = 0 / W-1):
    #   M[dy][w'*C_in + c, w*C_in + c] = ks[dy, w' - w + 1, c] for |w'-w| <= 1.
    m_list = []
    for dy in range(3):
        m = jnp.zeros((WCi, WCi), f32)
        for dx in range(3):
            P = jnp.eye(W, k=1 - dx, dtype=f32)    # P[w + dx - 1, w] = 1
            m = m + jnp.kron(P, jnp.diag(ks[dy, dx]))
        m_list.append(m)
    M = jnp.stack(m_list)                           # (3, WCi, WCi)

    # Grouped 1x1 conv as a block-diagonal (C_in, C_out) matrix with the BN2
    # scale folded into its columns, lifted to (W*C_in, W*C_out).
    cin_g, cout_g = C_in // groups, C_out // groups
    pw_bd = jnp.zeros((C_in, C_out), f32)
    for g in range(groups):
        blk = pw_w_pt[g * cout_g:(g + 1) * cout_g, :, 0, 0]      # (cout_g, cin_g)
        pw_bd = pw_bd.at[g * cin_g:(g + 1) * cin_g,
                         g * cout_g:(g + 1) * cout_g].set(blk.T)
    pw_bd = pw_bd * bn2_scale[None, :]
    W2 = jnp.kron(jnp.eye(W, dtype=f32), pw_bd)                  # (WCi, WCo)

    b1 = jnp.tile(bn1_bias.astype(f32), W).reshape(1, WCi)
    b2 = jnp.tile(bn2_bias.astype(f32), W).reshape(1, WCo)
    return S, M, b1, W2, b2


def dwsg_conv_pallas_nhwc(x_nhwc, S, M, b1, W2, b2):
    """Fused DWSGConv forward.  NHWC in, NHWC out (lane-dense fast path)."""
    N, H, W, C_in = x_nhwc.shape
    WCi = W * C_in
    WCo = W2.shape[1]
    C_out = WCo // W

    # Row-major metadata reshape: NHWC -> (N, H, W*C_in). No data movement.
    x_flat = x_nhwc.reshape(N, H, WCi)

    kernel = functools.partial(dwsg_kernel, H=H, WCi=WCi, WCo=WCo)

    out_flat = pl.pallas_call(
        kernel,
        out_shape=jax.ShapeDtypeStruct((N, H, WCo), x_nhwc.dtype),
        grid_spec=pltpu.PrefetchScalarGridSpec(
            num_scalar_prefetch=0,
            grid=(N,),
            in_specs=[
                pl.BlockSpec((1, H, WCi), lambda n: (n, 0, 0)),   # x (lane-dense)
                pl.BlockSpec((3, H, H), lambda n: (0, 0, 0)),     # S row shifts
                pl.BlockSpec((3, WCi, WCi), lambda n: (0, 0, 0)),  # M lane mixes
                pl.BlockSpec((1, WCi), lambda n: (0, 0)),          # bn1 bias
                pl.BlockSpec((WCi, WCo), lambda n: (0, 0)),        # grouped 1x1
                pl.BlockSpec((1, WCo), lambda n: (0, 0)),          # bn2 bias
            ],
            out_specs=pl.BlockSpec((1, H, WCo), lambda n: (n, 0, 0)),
        ),
        compiler_params=pltpu.CompilerParams(
            dimension_semantics=("parallel",),
            vmem_limit_bytes=32 * 1024 * 1024,
        ),
    )(x_flat, S, M, b1, W2, b2)

    # Metadata reshape back to NHWC.
    return out_flat.reshape(N, H, W, C_out)


def reference_forward(x, dw_w_pt, pw_w_pt, groups,
                      bn1_scale, bn1_bias, bn2_scale, bn2_bias):
    """Pure-JAX reference following PyTorch (NCHW / OIHW) semantics."""
    C_in = x.shape[1]
    y = jax.lax.conv_general_dilated(
        x, dw_w_pt, window_strides=(1, 1), padding=((1, 1), (1, 1)),
        feature_group_count=C_in,
        dimension_numbers=('NCHW', 'OIHW', 'NCHW'))
    y = y * bn1_scale[None, :, None, None] + bn1_bias[None, :, None, None]
    y = jnp.maximum(y, 0.0)
    z = jax.lax.conv_general_dilated(
        y, pw_w_pt, window_strides=(1, 1), padding='VALID',
        feature_group_count=groups,
        dimension_numbers=('NCHW', 'OIHW', 'NCHW'))
    z = z * bn2_scale[None, :, None, None] + bn2_bias[None, :, None, None]
    return jnp.maximum(z, 0.0)


if __name__ == "__main__":
    # Small shapes consistent with the module (groups=4 requires C % 4 == 0).
    N, C_in, H, W = 2, 8, 16, 16
    C_out, groups = 16, 4
    eps = 1e-5

    key = jax.random.PRNGKey(0)
    kx, kdw, kpw, kb1, kb2 = jax.random.split(key, 5)
    kg1, kbt1, km1, kv1 = jax.random.split(kb1, 4)
    kg2, kbt2, km2, kv2 = jax.random.split(kb2, 4)

    # Input in PyTorch NCHW convention (for the reference).
    x_nchw = jax.random.normal(kx, (N, C_in, H, W), jnp.float32)

    # Depthwise conv weight, PyTorch shape (C_in, 1, 3, 3).
    dw_w_pt = 0.1 * jax.random.normal(kdw, (C_in, 1, 3, 3), jnp.float32)
    # Grouped 1x1 conv weight, PyTorch shape (C_out, C_in//groups, 1, 1).
    pw_w_pt = 0.1 * jax.random.normal(kpw, (C_out, C_in // groups, 1, 1),
                                      jnp.float32)

    # BatchNorm parameters (eval mode), folded into scale/bias.
    gamma1 = 1.0 + 0.1 * jax.random.normal(kg1, (C_in,), jnp.float32)
    beta1 = 0.1 * jax.random.normal(kbt1, (C_in,), jnp.float32)
    mean1 = 0.1 * jax.random.normal(km1, (C_in,), jnp.float32)
    var1 = jnp.abs(jax.random.normal(kv1, (C_in,), jnp.float32)) + 0.5
    bn1_scale = gamma1 / jnp.sqrt(var1 + eps)
    bn1_bias = beta1 - mean1 * bn1_scale

    gamma2 = 1.0 + 0.1 * jax.random.normal(kg2, (C_out,), jnp.float32)
    beta2 = 0.1 * jax.random.normal(kbt2, (C_out,), jnp.float32)
    mean2 = 0.1 * jax.random.normal(km2, (C_out,), jnp.float32)
    var2 = jnp.abs(jax.random.normal(kv2, (C_out,), jnp.float32)) + 0.5
    bn2_scale = gamma2 / jnp.sqrt(var2 + eps)
    bn2_bias = beta2 - mean2 * bn2_scale

    # One-time weight prep (tiny arrays): fold BN, build lane-merged matrices.
    S, M, b1, W2, b2 = build_dwsg_params(
        dw_w_pt, pw_w_pt, groups, bn1_scale, bn1_bias, bn2_scale, bn2_bias,
        H, W)

    # The fused op is NHWC-native; this transpose is test plumbing only
    # (the kernel wrapper itself does no transposes and no padding).
    x_nhwc = jnp.transpose(x_nchw, (0, 2, 3, 1))

    out_nhwc = dwsg_conv_pallas_nhwc(x_nhwc, S, M, b1, W2, b2)
    out_nhwc = jax.block_until_ready(out_nhwc)
    assert out_nhwc.shape == (N, H, W, C_out), out_nhwc.shape

    ref_nchw = reference_forward(x_nchw, dw_w_pt, pw_w_pt, groups,
                                 bn1_scale, bn1_bias, bn2_scale, bn2_bias)
    ref_nhwc = jnp.transpose(jax.block_until_ready(ref_nchw), (0, 2, 3, 1))

    max_err = float(jnp.max(jnp.abs(out_nhwc - ref_nhwc)))
    assert jnp.allclose(out_nhwc, ref_nhwc, atol=1e-4, rtol=1e-4), max_err

    print("KERNEL_OK")
</pallas_src>

<mosaic_0001>
module attributes {stable_mosaic.version = 11 : i64} {
  func.func @dwsg_kernel(%arg0: i32, %arg1: memref<1x16x128xf32, #tpu.memory_space<vmem>>, %arg2: memref<3x16x16xf32, #tpu.memory_space<vmem>>, %arg3: memref<3x128x128xf32, #tpu.memory_space<vmem>>, %arg4: memref<1x128xf32, #tpu.memory_space<vmem>>, %arg5: memref<128x256xf32, #tpu.memory_space<vmem>>, %arg6: memref<1x256xf32, #tpu.memory_space<vmem>>, %arg7: memref<1x16x256xf32, #tpu.memory_space<vmem>>) attributes {dimension_semantics = [#tpu.dimension_semantics<parallel>], iteration_bounds = array<i64: 2>, scalar_prefetch = 0 : i64, scratch_operands = 0 : i64, tpu.core_type = #tpu.core_type<tc>, window_params = [{transform_indices = @transform_0, window_bounds = array<i64: 1, 16, 128>}, {pipeline_mode = #tpu.pipeline_mode<synchronous>, transform_indices = @transform_1, window_bounds = array<i64: 3, 16, 16>}, {pipeline_mode = #tpu.pipeline_mode<synchronous>, transform_indices = @transform_2, window_bounds = array<i64: 3, 128, 128>}, {pipeline_mode = #tpu.pipeline_mode<synchronous>, transform_indices = @transform_3, window_bounds = array<i64: 1, 128>}, {pipeline_mode = #tpu.pipeline_mode<synchronous>, transform_indices = @transform_4, window_bounds = array<i64: 128, 256>}, {pipeline_mode = #tpu.pipeline_mode<synchronous>, transform_indices = @transform_5, window_bounds = array<i64: 1, 256>}, {transform_indices = @transform_6, window_bounds = array<i64: 1, 16, 256>}]} {
    %c0 = arith.constant 0 : index
    %c0_0 = arith.constant 0 : index
    %c0_1 = arith.constant 0 : index
    %0 = vector.load %arg1[%c0, %c0_0, %c0_1] : memref<1x16x128xf32, #tpu.memory_space<vmem>>, vector<1x16x128xf32>
    %1 = vector.shape_cast %0 : vector<1x16x128xf32> to vector<16x128xf32>
    %cst = arith.constant 0.000000e+00 : f32
    %2 = vector.broadcast %cst : f32 to vector<16x128xf32>
    %c0_2 = arith.constant 0 : index
    %c0_3 = arith.constant 0 : index
    %c0_4 = arith.constant 0 : index
    %3 = vector.load %arg2[%c0_2, %c0_3, %c0_4] : memref<3x16x16xf32, #tpu.memory_space<vmem>>, vector<1x16x16xf32>
    %4 = vector.shape_cast %3 : vector<1x16x16xf32> to vector<16x16xf32>
    %cst_5 = arith.constant dense<0.000000e+00> : vector<16x128xf32>
    %5 = tpu.matmul %4, %1, %cst_5 {dimension_numbers = #tpu.dot_dimension_numbers<[1], [0], [0], [1], [0, 0, 1, 1], [], []>} : vector<16x16xf32>, vector<16x128xf32>, vector<16x128xf32> -> vector<16x128xf32>
    %c0_6 = arith.constant 0 : index
    %c0_7 = arith.constant 0 : index
    %c0_8 = arith.constant 0 : index
    %6 = vector.load %arg3[%c0_6, %c0_7, %c0_8] : memref<3x128x128xf32, #tpu.memory_space<vmem>>, vector<1x128x128xf32>
    %7 = vector.shape_cast %6 : vector<1x128x128xf32> to vector<128x128xf32>
    %cst_9 = arith.constant dense<0.000000e+00> : vector<16x128xf32>
    %8 = tpu.matmul %5, %7, %cst_9 {dimension_numbers = #tpu.dot_dimension_numbers<[1], [0], [0], [1], [0, 0, 1, 1], [], []>} : vector<16x128xf32>, vector<128x128xf32>, vector<16x128xf32> -> vector<16x128xf32>
    %9 = arith.addf %2, %8 : vector<16x128xf32>
    %c1 = arith.constant 1 : index
    %c0_10 = arith.constant 0 : index
    %c0_11 = arith.constant 0 : index
    %10 = vector.load %arg2[%c1, %c0_10, %c0_11] : memref<3x16x16xf32, #tpu.memory_space<vmem>>, vector<1x16x16xf32>
    %11 = vector.shape_cast %10 : vector<1x16x16xf32> to vector<16x16xf32>
    %cst_12 = arith.constant dense<0.000000e+00> : vector<16x128xf32>
    %12 = tpu.matmul %11, %1, %cst_12 {dimension_numbers = #tpu.dot_dimension_numbers<[1], [0], [0], [1], [0, 0, 1, 1], [], []>} : vector<16x16xf32>, vector<16x128xf32>, vector<16x128xf32> -> vector<16x128xf32>
    %c1_13 = arith.constant 1 : index
    %c0_14 = arith.constant 0 : index
    %c0_15 = arith.constant 0 : index
    %13 = vector.load %arg3[%c1_13, %c0_14, %c0_15] : memref<3x128x128xf32, #tpu.memory_space<vmem>>, vector<1x128x128xf32>
    %14 = vector.shape_cast %13 : vector<1x128x128xf32> to vector<128x128xf32>
    %cst_16 = arith.constant dense<0.000000e+00> : vector<16x128xf32>
    %15 = tpu.matmul %12, %14, %cst_16 {dimension_numbers = #tpu.dot_dimension_numbers<[1], [0], [0], [1], [0, 0, 1, 1], [], []>} : vector<16x128xf32>, vector<128x128xf32>, vector<16x128xf32> -> vector<16x128xf32>
    %16 = arith.addf %9, %15 : vector<16x128xf32>
    %c2 = arith.constant 2 : index
    %c0_17 = arith.constant 0 : index
    %c0_18 = arith.constant 0 : index
    %17 = vector.load %arg2[%c2, %c0_17, %c0_18] : memref<3x16x16xf32, #tpu.memory_space<vmem>>, vector<1x16x16xf32>
    %18 = vector.shape_cast %17 : vector<1x16x16xf32> to vector<16x16xf32>
    %cst_19 = arith.constant dense<0.000000e+00> : vector<16x128xf32>
    %19 = tpu.matmul %18, %1, %cst_19 {dimension_numbers = #tpu.dot_dimension_numbers<[1], [0], [0], [1], [0, 0, 1, 1], [], []>} : vector<16x16xf32>, vector<16x128xf32>, vector<16x128xf32> -> vector<16x128xf32>
    %c2_20 = arith.constant 2 : index
    %c0_21 = arith.constant 0 : index
    %c0_22 = arith.constant 0 : index
    %20 = vector.load %arg3[%c2_20, %c0_21, %c0_22] : memref<3x128x128xf32, #tpu.memory_space<vmem>>, vector<1x128x128xf32>
    %21 = vector.shape_cast %20 : vector<1x128x128xf32> to vector<128x128xf32>
    %cst_23 = arith.constant dense<0.000000e+00> : vector<16x128xf32>
    %22 = tpu.matmul %19, %21, %cst_23 {dimension_numbers = #tpu.dot_dimension_numbers<[1], [0], [0], [1], [0, 0, 1, 1], [], []>} : vector<16x128xf32>, vector<128x128xf32>, vector<16x128xf32> -> vector<16x128xf32>
    %23 = arith.addf %16, %22 : vector<16x128xf32>
    %c0_24 = arith.constant 0 : index
    %c0_25 = arith.constant 0 : index
    %24 = vector.load %arg4[%c0_24, %c0_25] : memref<1x128xf32, #tpu.memory_space<vmem>>, vector<1x128xf32>
    %25 = vector.broadcast %24 : vector<1x128xf32> to vector<16x128xf32>
    %26 = arith.addf %23, %25 : vector<16x128xf32>
    %cst_26 = arith.constant 0.000000e+00 : f32
    %27 = vector.broadcast %cst_26 : f32 to vector<16x128xf32>
    %28 = arith.maximumf %26, %27 : vector<16x128xf32>
    %c0_27 = arith.constant 0 : index
    %c0_28 = arith.constant 0 : index
    %29 = vector.load %arg5[%c0_27, %c0_28] : memref<128x256xf32, #tpu.memory_space<vmem>>, vector<128x256xf32>
    %cst_29 = arith.constant dense<0.000000e+00> : vector<16x256xf32>
    %30 = tpu.matmul %28, %29, %cst_29 {dimension_numbers = #tpu.dot_dimension_numbers<[1], [0], [0], [1], [0, 0, 1, 1], [], []>} : vector<16x128xf32>, vector<128x256xf32>, vector<16x256xf32> -> vector<16x256xf32>
    %c0_30 = arith.constant 0 : index
    %c0_31 = arith.constant 0 : index
    %31 = vector.load %arg6[%c0_30, %c0_31] : memref<1x256xf32, #tpu.memory_space<vmem>>, vector<1x256xf32>
    %32 = vector.broadcast %31 : vector<1x256xf32> to vector<16x256xf32>
    %33 = arith.addf %30, %32 : vector<16x256xf32>
    %cst_32 = arith.constant 0.000000e+00 : f32
    %34 = vector.broadcast %cst_32 : f32 to vector<16x256xf32>
    %35 = arith.maximumf %33, %34 : vector<16x256xf32>
    %36 = vector.shape_cast %35 : vector<16x256xf32> to vector<1x16x256xf32>
    %c0_33 = arith.constant 0 : index
    %c0_34 = arith.constant 0 : index
    %c0_35 = arith.constant 0 : index
    %37 = vector.load %arg7[%c0_33, %c0_34, %c0_35] : memref<1x16x256xf32, #tpu.memory_space<vmem>>, vector<1x16x256xf32>
    tpu.vector_store %arg7[%c0_33, %c0_34, %c0_35], %36 {strides = array<i32>} : memref<1x16x256xf32, #tpu.memory_space<vmem>>, vector<1x16x256xf32>,
    return
  }
  func.func @transform_0(%arg0: i32) -> (i32, i32, i32) {
    %c0_i32 = arith.constant 0 : i32
    %c0_i32_0 = arith.constant 0 : i32
    %c0_i32_1 = arith.constant 0 : i32
    return %arg0, %c0_i32, %c0_i32_0 : i32, i32, i32
  }
  func.func @transform_1(%arg0: i32) -> (i32, i32, i32) {
    %c0_i32 = arith.constant 0 : i32
    %c0_i32_0 = arith.constant 0 : i32
    %c0_i32_1 = arith.constant 0 : i32
    %c0_i32_2 = arith.constant 0 : i32
    return %c0_i32, %c0_i32_0, %c0_i32_1 : i32, i32, i32
  }
  func.func @transform_2(%arg0: i32) -> (i32, i32, i32) {
    %c0_i32 = arith.constant 0 : i32
    %c0_i32_0 = arith.constant 0 : i32
    %c0_i32_1 = arith.constant 0 : i32
    %c0_i32_2 = arith.constant 0 : i32
    return %c0_i32, %c0_i32_0, %c0_i32_1 : i32, i32, i32
  }
  func.func @transform_3(%arg0: i32) -> (i32, i32) {
    %c0_i32 = arith.constant 0 : i32
    %c0_i32_0 = arith.constant 0 : i32
    %c0_i32_1 = arith.constant 0 : i32
    return %c0_i32, %c0_i32_0 : i32, i32
  }
  func.func @transform_4(%arg0: i32) -> (i32, i32) {
    %c0_i32 = arith.constant 0 : i32
    %c0_i32_0 = arith.constant 0 : i32
    %c0_i32_1 = arith.constant 0 : i32
    return %c0_i32, %c0_i32_0 : i32, i32
  }
  func.func @transform_5(%arg0: i32) -> (i32, i32) {
    %c0_i32 = arith.constant 0 : i32
    %c0_i32_0 = arith.constant 0 : i32
    %c0_i32_1 = arith.constant 0 : i32
    return %c0_i32, %c0_i32_0 : i32, i32
  }
  func.func @transform_6(%arg0: i32) -> (i32, i32, i32) {
    %c0_i32 = arith.constant 0 : i32
    %c0_i32_0 = arith.constant 0 : i32
    %c0_i32_1 = arith.constant 0 : i32
    return %arg0, %c0_i32, %c0_i32_0 : i32, i32, i32
  }
}

</mosaic_0001>

<llo_original>
// kernel: tpu_custom_call.1
$region0: #{tpu_custom_call.1}
  #allocation0 [shape = 'u32[]', space=smem, size = 0x4, offset = 0x4, fixed_abs, tag = 'smem constant byte address 0x4 - core index']
  #allocation1 [shape = 'u32[144,128]{1,0:T(1,128)}', space=vmem, size = 0x12000, scoped, tag = 'internal scratch']
  %s0 = inlined_call_operand.hbm [shape: f32[2,16,128], index: 0, kind: input, shape index: {}]
  %s1 = inlined_call_operand.hbm [shape: f32[3,16,16], index: 1, kind: input, shape index: {}]
  %s2 = inlined_call_operand.hbm [shape: f32[3,128,128], index: 2, kind: input, shape index: {}]
  %s3 = inlined_call_operand.vmem [shape: f32[1,128], index: 3, kind: input, shape index: {}]
  %s4 = inlined_call_operand.hbm [shape: f32[128,256], index: 4, kind: input, shape index: {}]
  %s5 = inlined_call_operand.vmem [shape: f32[1,256], index: 5, kind: input, shape index: {}]
  %s6 = inlined_call_operand.hbm [shape: f32[2,16,256], index: 6, kind: output, shape index: {}]
  %s7 = sld [smem:[#allocation0]]
  $region73: #{tpu_custom_call.1} parent=0
    _
  %s9 = ssub.s32 1, %s7
  %s10 = scalar_select 0, %s9, %s7
  $region1: #{tpu_custom_call.1} parent=0
    #allocation2 [shape = 'u8[16384]{0}', space=vmem, size = 0x4000, scoped, tag = 'input window, operand 0']
    #allocation3 [shape = 's32[2]{0}', space=sflag, size = 0x8, scoped, tag = 'scoped memory for tpu_custom_call.1']
    #allocation4 [shape = 's32[2]{0}', space=sflag, size = 0x8, scoped, tag = 'scoped memory for tpu_custom_call.1']
    #allocation5 [shape = 'u8[24576]{0}', space=vmem, size = 0x6000, scoped, tag = 'input window, operand 1, single buffered']
    #allocation6 [shape = 's32[1]{0}', space=sflag, size = 0x4, scoped, tag = 'scoped memory for tpu_custom_call.1']
    #allocation7 [shape = 'u8[196608]{0}', space=vmem, size = 0x30000, scoped, tag = 'input window, operand 2, single buffered']
    #allocation8 [shape = 'u8[131072]{0}', space=vmem, size = 0x20000, scoped, tag = 'input window, operand 4, single buffered']
    #allocation9 [shape = 's32[1]{0}', space=sflag, size = 0x4, scoped, tag = 'scoped memory for tpu_custom_call.1']
    #allocation10 [shape = 'u8[32768]{0}', space=vmem, size = 0x8000, scoped, tag = 'output window, operand 0']
    %11 = vsyncpa [#allocation3], 0
    %s12 = scalar_lea.sflag [#allocation3], 1
    %13 = vsyncpa %s12, 0
    %14 = vsyncpa [#allocation6], 0
    %15 = vsyncpa [#allocation9], 0
    %16 = vsyncpa [#allocation4], 0
    %s17 = scalar_lea.sflag [#allocation4], 1
    %18 = vsyncpa %s17, 0
    loop: start=0, step=1, limit=4
    $region2: #{tpu_custom_call.1} parent=1 // loop_pre_header
      _
    $region3: #{tpu_custom_call.1} parent=1 // loop_header
      %s20 = sphi 0, %s24
      %p21 = scmp.ge.s32.totalorder %s20, 4
      %s30 = sphi 0, %s32
      %s33 = sphi 0, %s30
      %s34 = sphi 0, %s33
      %s50 = sphi 0, %s34
      %s54 = sphi 0, %s54
      %s56 = sphi 0, %s54
      %s57 = sphi 0, %s56
      %s71 = sphi 0, %s57
      %s75 = sphi 0, %s75
      %s77 = sphi 0, %s75
      %s78 = sphi 0, %s77
      %s92 = sphi 0, %s78
      %s96 = sphi 0, %s96
      %s98 = sphi 0, %s96
      %s99 = sphi 0, %s98
      %s113 = sphi 0, %s99
      %s117 = sphi 0, %s117
      %s119 = sphi 0, %s117
      %s120 = sphi 0, %s119
      %s134 = sphi 0, %s120
      %s138 = sphi 0, %s138
      %s140 = sphi 0, %s138
      %s141 = sphi 0, %s140
      %s155 = sphi 0, %s141
      %s161 = sphi 0, %s163
      %s164 = sphi 0, %s161
      %s165 = sphi 0, %s164
      %s181 = sphi 0, %s165
    $region4: #{tpu_custom_call.1} parent=1 // loop_header_branch
      %23 = sbr.rel (%p21) target = $region8
    $region5: #{tpu_custom_call.1} parent=1 // loop_body
      %s25 = ssub.s32 %s20, 1
      %s26 = ssub.s32 %s20, 2
      %s27 = sadd.s32 %s20, 1
      %s28 = ssub.s32 %s20, %s27
      %p29 = scmp.eq.s32.totalorder %s28, 0
      %s31 = sadd.s32 %s30, 1
      %s32 = scalar_select %p29, %s30, %s31
      %p35 = pneg %p29
      %p36 = scmp.eq.s32.totalorder %s20, 1
      %p37 = por %p35, %p36
      %p38 = scmp.ne.s32.totalorder %s30, %s33
      %p39 = scmp.eq.s32.totalorder %s20, 0
      %p40 = por %p38, %p39
      %p41 = scmp.ne.s32.totalorder %s30, %s33
      %p42 = scmp.eq.s32.totalorder %s25, 1
      %p43 = por %p41, %p42
      %p44 = scmp.ne.s32.totalorder %s33, %s34
      %p45 = scmp.eq.s32.totalorder %s25, 0
      %p46 = por %p44, %p45
      %p47 = scmp.ne.s32.totalorder %s33, %s34
      %p48 = scmp.eq.s32.totalorder %s26, 1
      %p49 = por %p47, %p48
      %p51 = scmp.ne.s32.totalorder %s34, %s50
      %p52 = scmp.eq.s32.totalorder %s26, 0
      %p53 = por %p51, %p52
      %s55 = sadd.s32 %s54, 1
      %p58 = scmp.eq.s32.totalorder %s20, 1
      %p59 = scmp.ne.s32.totalorder %s54, %s56
      %p60 = scmp.eq.s32.totalorder %s20, 0
      %p61 = por %p59, %p60
      %p62 = scmp.ne.s32.totalorder %s54, %s56
      %p63 = scmp.eq.s32.totalorder %s25, 1
      %p64 = por %p62, %p63
      %p65 = scmp.ne.s32.totalorder %s56, %s57
      %p66 = scmp.eq.s32.totalorder %s25, 0
      %p67 = por %p65, %p66
      %p68 = scmp.ne.s32.totalorder %s56, %s57
      %p69 = scmp.eq.s32.totalorder %s26, 1
      %p70 = por %p68, %p69
      %p72 = scmp.ne.s32.totalorder %s57, %s71
      %p73 = scmp.eq.s32.totalorder %s26, 0
      %p74 = por %p72, %p73
      %s76 = sadd.s32 %s75, 1
      %p79 = scmp.eq.s32.totalorder %s20, 1
      %p80 = scmp.ne.s32.totalorder %s75, %s77
      %p81 = scmp.eq.s32.totalorder %s20, 0
      %p82 = por %p80, %p81
      %p83 = scmp.ne.s32.totalorder %s75, %s77
      %p84 = scmp.eq.s32.totalorder %s25, 1
      %p85 = por %p83, %p84
      %p86 = scmp.ne.s32.totalorder %s77, %s78
      %p87 = scmp.eq.s32.totalorder %s25, 0
      %p88 = por %p86, %p87
      %p89 = scmp.ne.s32.totalorder %s77, %s78
      %p90 = scmp.eq.s32.totalorder %s26, 1
      %p91 = por %p89, %p90
      %p93 = scmp.ne.s32.totalorder %s78, %s92
      %p94 = scmp.eq.s32.totalorder %s26, 0
      %p95 = por %p93, %p94
      %s97 = sadd.s32 %s96, 1
      %p100 = scmp.eq.s32.totalorder %s20, 1
      %p101 = scmp.ne.s32.totalorder %s96, %s98
      %p102 = scmp.eq.s32.totalorder %s20, 0
      %p103 = por %p101, %p102
      %p104 = scmp.ne.s32.totalorder %s96, %s98
      %p105 = scmp.eq.s32.totalorder %s25, 1
      %p106 = por %p104, %p105
      %p107 = scmp.ne.s32.totalorder %s98, %s99
      %p108 = scmp.eq.s32.totalorder %s25, 0
      %p109 = por %p107, %p108
      %p110 = scmp.ne.s32.totalorder %s98, %s99
      %p111 = scmp.eq.s32.totalorder %s26, 1
      %p112 = por %p110, %p111
      %p114 = scmp.ne.s32.totalorder %s99, %s113
      %p115 = scmp.eq.s32.totalorder %s26, 0
      %p116 = por %p114, %p115
      %s118 = sadd.s32 %s117, 1
      %p121 = scmp.eq.s32.totalorder %s20, 1
      %p122 = scmp.ne.s32.totalorder %s117, %s119
      %p123 = scmp.eq.s32.totalorder %s20, 0
      %p124 = por %p122, %p123
      %p125 = scmp.ne.s32.totalorder %s117, %s119
      %p126 = scmp.eq.s32.totalorder %s25, 1
      %p127 = por %p125, %p126
      %p128 = scmp.ne.s32.totalorder %s119, %s120
      %p129 = scmp.eq.s32.totalorder %s25, 0
      %p130 = por %p128, %p129
      %p131 = scmp.ne.s32.totalorder %s119, %s120
      %p132 = scmp.eq.s32.totalorder %s26, 1
      %p133 = por %p131, %p132
      %p135 = scmp.ne.s32.totalorder %s120, %s134
      %p136 = scmp.eq.s32.totalorder %s26, 0
      %p137 = por %p135, %p136
      %s139 = sadd.s32 %s138, 1
      %p142 = scmp.eq.s32.totalorder %s20, 1
      %p143 = scmp.ne.s32.totalorder %s138, %s140
      %p144 = scmp.eq.s32.totalorder %s20, 0
      %p145 = por %p143, %p144
      %p146 = scmp.ne.s32.totalorder %s138, %s140
      %p147 = scmp.eq.s32.totalorder %s25, 1
      %p148 = por %p146, %p147
      %p149 = scmp.ne.s32.totalorder %s140, %s141
      %p150 = scmp.eq.s32.totalorder %s25, 0
      %p151 = por %p149, %p150
      %p152 = scmp.ne.s32.totalorder %s140, %s141
      %p153 = scmp.eq.s32.totalorder %s26, 1
      %p154 = por %p152, %p153
      %p156 = scmp.ne.s32.totalorder %s141, %s155
      %p157 = scmp.eq.s32.totalorder %s26, 0
      %p158 = por %p156, %p157
      %s159 = ssub.s32 %s20, %s27
      %p160 = scmp.eq.s32.totalorder %s159, 0
      %s162 = sadd.s32 %s161, 1
      %s163 = scalar_select %p160, %s161, %s162
      %p166 = pneg %p160
      %p167 = scmp.eq.s32.totalorder %s20, 1
      %p168 = por %p166, %p167
      %p169 = scmp.ne.s32.totalorder %s161, %s164
      %p170 = scmp.eq.s32.totalorder %s20, 0
      %p171 = por %p169, %p170
      %p172 = scmp.ne.s32.totalorder %s161, %s164
      %p173 = scmp.eq.s32.totalorder %s25, 1
      %p174 = por %p172, %p173
      %p175 = scmp.ne.s32.totalorder %s164, %s165
      %p176 = scmp.eq.s32.totalorder %s25, 0
      %p177 = por %p175, %p176
      %p178 = scmp.ne.s32.totalorder %s164, %s165
      %p179 = scmp.eq.s32.totalorder %s26, 1
      %p180 = por %p178, %p179
      %p182 = scmp.ne.s32.totalorder %s165, %s181
      %p183 = scmp.eq.s32.totalorder %s26, 0
      %p184 = por %p182, %p183
      %p185 = scmp.le.s32.totalorder 1, %s20
      %p186 = scmp.lt.s32.totalorder %s20, 3
      %p187 = pnand %p185, %p186
      %p188 = pneg %p187
      // Predicated region
      $region9: #{tpu_custom_call.1} parent=5 // pred_check
        _
      $region10: #{tpu_custom_call.1} parent=5 // pred_check_branch
        %190 = sbr.rel (%p187) target = $region12
      $region11: #{tpu_custom_call.1} parent=5 // pred_region
        %s191 = ssub.s32 %s20, 1
        // Predicated region
        $region13: #{tpu_custom_call.1} parent=11 // pred_check
          %p192 = pneg %p67
        $region14: #{tpu_custom_call.1} parent=11 // pred_check_branch
          %194 = sbr.rel (%p192) target = $region16
        $region15: #{tpu_custom_call.1} parent=11 // pred_region
          %s196 = ssub.s32 768, 768
          %197 = vsyncadd [#allocation6], %s196
          %s198 = sshll.u32 [#allocation5], 4
          %s199 = int_to_ptr.vmem [resolvable:$true] %s198
          %204 = dma.hbm_to_vmem [thread:$0]  %s1, 768, %s199, [#allocation6], 128, 128, 8
        $region16: #{tpu_custom_call.1} parent=11 // pred_fallthru
          _
        // Predicated region
        $region17: #{tpu_custom_call.1} parent=11 // pred_check
          %p205 = pneg %p88
        $region18: #{tpu_custom_call.1} parent=11 // pred_check_branch
          %207 = sbr.rel (%p205) target = $region20
        $region19: #{tpu_custom_call.1} parent=11 // pred_region
          %s209 = ssub.s32 6144, 6144
          %210 = vsyncadd [#allocation6], %s209
          %s211 = sshll.u32 [#allocation7], 4
          %s212 = int_to_ptr.vmem [resolvable:$true] %s211
          %217 = dma.hbm_to_vmem [thread:$0]  %s2, 6144, %s212, [#allocation6], 128, 128, 8
        $region20: #{tpu_custom_call.1} parent=11 // pred_fallthru
          _
        // Predicated region
        $region21: #{tpu_custom_call.1} parent=11 // pred_check
          %p218 = pneg %p109
        $region22: #{tpu_custom_call.1} parent=11 // pred_check_branch
          %220 = sbr.rel (%p218) target = $region24
        $region23: #{tpu_custom_call.1} parent=11 // pred_region
          _
        $region24: #{tpu_custom_call.1} parent=11 // pred_fallthru
          _
        // Predicated region
        $region25: #{tpu_custom_call.1} parent=11 // pred_check
          %p221 = pneg %p130
        $region26: #{tpu_custom_call.1} parent=11 // pred_check_branch
          %223 = sbr.rel (%p221) target = $region28
        $region27: #{tpu_custom_call.1} parent=11 // pred_region
          %s225 = ssub.s32 4096, 4096
          %226 = vsyncadd [#allocation9], %s225
          %s227 = sshll.u32 [#allocation8], 4
          %s228 = int_to_ptr.vmem [resolvable:$true] %s227
          %233 = dma.hbm_to_vmem [thread:$0]  %s4, 4096, %s228, [#allocation9], 256, 256, 16
        $region28: #{tpu_custom_call.1} parent=11 // pred_fallthru
          _
        // Predicated region
        $region29: #{tpu_custom_call.1} parent=11 // pred_check
          %p234 = pneg %p151
        $region30: #{tpu_custom_call.1} parent=11 // pred_check_branch
          %236 = sbr.rel (%p234) target = $region32
        $region31: #{tpu_custom_call.1} parent=11 // pred_region
          _
        $region32: #{tpu_custom_call.1} parent=11 // pred_fallthru
          _
      $region12: #{tpu_custom_call.1} parent=5 // pred_fallthru
        _
      %p237 = scmp.lt.s32.totalorder %s20, 2
      // Predicated region
      $region33: #{tpu_custom_call.1} parent=5 // pred_check
        %p238 = pneg %p237
      $region34: #{tpu_custom_call.1} parent=5 // pred_check_branch
        %240 = sbr.rel (%p238) target = $region36
      $region35: #{tpu_custom_call.1} parent=5 // pred_region
        // Predicated region
        $region37: #{tpu_custom_call.1} parent=35 // pred_check
          %p241 = pneg %p40
        $region38: #{tpu_custom_call.1} parent=35 // pred_check_branch
          %243 = sbr.rel (%p241) target = $region40
        $region39: #{tpu_custom_call.1} parent=35 // pred_region
          %s244 = sand.u32 %s30, 1
          %s245 = scalar_lea.sflag [#allocation3], %s244
          %s246 = sand.u32 %s30, 1
          %s247 = smul.addr %s246, 16
          %s248 = scalar_lea.vmem [#allocation2], %s247
          %s250 = ssub.s32 256, 256
          %251 = vsyncadd %s245, %s250
          %s252 = smul.addr %s20, 2
          %s253 = smul.addr %s252, 128
          %s254 = scalar_lea.hbm %s0, %s253
          %s255 = sshll.u32 %s248, 4
          %s256 = int_to_ptr.vmem [resolvable:$true] %s255
          %261 = dma.hbm_to_vmem [thread:$0]  %s254, 256, %s256, %s245, 128, 128, 8
        $region40: #{tpu_custom_call.1} parent=35 // pred_fallthru
          _
      $region36: #{tpu_custom_call.1} parent=5 // pred_fallthru
        _
      %p262 = scmp.le.s32.totalorder 1, %s20
      %p263 = scmp.lt.s32.totalorder %s20, 3
      %p264 = pnand %p262, %p263
      %p265 = pneg %p264
      // Predicated region
      $region41: #{tpu_custom_call.1} parent=5 // pred_check
        _
      $region42: #{tpu_custom_call.1} parent=5 // pred_check_branch
        %267 = sbr.rel (%p264) target = $region44
      $region43: #{tpu_custom_call.1} parent=5 // pred_region
        %s268 = ssub.s32 %s20, 1
        %s269 = sand.u32 %s33, 1
        %s270 = scalar_lea.sflag [#allocation3], %s269
        %s271 = sand.u32 %s33, 1
        %s272 = smul.addr %s271, 16
        %s273 = scalar_lea.vmem [#allocation2], %s272
        // Predicated region
        $region45: #{tpu_custom_call.1} parent=43 // pred_check
          %p274 = pneg %p46
        $region46: #{tpu_custom_call.1} parent=43 // pred_check_branch
          %276 = sbr.rel (%p274) target = $region48
        $region47: #{tpu_custom_call.1} parent=43 // pred_region
          %277 = dma.done %s270, 256
        $region48: #{tpu_custom_call.1} parent=43 // pred_fallthru
          _
        // Predicated region
        $region49: #{tpu_custom_call.1} parent=43 // pred_check
          %p278 = pneg %p67
        $region50: #{tpu_custom_call.1} parent=43 // pred_check_branch
          %280 = sbr.rel (%p278) target = $region52
        $region51: #{tpu_custom_call.1} parent=43 // pred_region
          %281 = dma.done [#allocation6], 768
        $region52: #{tpu_custom_call.1} parent=43 // pred_fallthru
          _
        // Predicated region
        $region53: #{tpu_custom_call.1} parent=43 // pred_check
          %p282 = pneg %p88
        $region54: #{tpu_custom_call.1} parent=43 // pred_check_branch
          %284 = sbr.rel (%p282) target = $region56
        $region55: #{tpu_custom_call.1} parent=43 // pred_region
          %285 = dma.done [#allocation6], 6144
        $region56: #{tpu_custom_call.1} parent=43 // pred_fallthru
          _
        // Predicated region
        $region57: #{tpu_custom_call.1} parent=43 // pred_check
          %p286 = pneg %p130
        $region58: #{tpu_custom_call.1} parent=43 // pred_check_branch
          %288 = sbr.rel (%p286) target = $region60
        $region59: #{tpu_custom_call.1} parent=43 // pred_region
          %289 = dma.done [#allocation9], 4096
        $region60: #{tpu_custom_call.1} parent=43 // pred_fallthru
          _
        %s290 = sand.u32 %s33, 1
        %s291 = scalar_lea.sflag [#allocation3], %s290
        %s292 = sand.u32 %s33, 1
        %s293 = smul.addr %s292, 16
        %s294 = scalar_lea.vmem [#allocation2], %s293
        %p295 = pneg %p46
        %p296 = pneg %p43
        %p297 = pneg %p67
        %p298 = pneg %p64
        %p299 = pneg %p88
        %p300 = pneg %p85
        %p301 = pneg %p109
        %p302 = pneg %p106
        %p303 = pneg %p130
        %p304 = pneg %p127
        %p305 = pneg %p151
        %p306 = pneg %p148
        %p307 = pneg %p177
        %p308 = pneg %p174
        %s309 = sand.u32 %s164, 1
        %s310 = scalar_lea.sflag [#allocation4], %s309
        %s311 = sand.u32 %s164, 1
        %s312 = smul.addr %s311, 32
        %s313 = scalar_lea.vmem [#allocation10], %s312
        %v314 = vld [vmem:[%s273] sm:$0xff]
        %v315 = vld [vmem:[%s273 + $0x8] sm:$0xff]
        %v316 = vld [vmem:[#allocation5] sm:$0xff]
        %v317 = vld [vmem:[#allocation5 + $0x8] sm:$0xff]
        %vm318 = vcmask 130048
        %v320 = vsel %vm318, %v316, 0
        %v323 = vsel %vm318, %v317, 0
        %325 = vmatprep.subr.mxu0 0.0
        %326 = vmatpush1.msra.mxu0 %v314
        %327 = vmatprep.subr.mxu0 0.0
        %328 = vmatpush1.msra.mxu0 %v315
        %329 = vmatprep.subr.mxu0 0.0
        %330 = vmatpush1.msra.mxu0 0.0
        %331 = vmatprep.subr.mxu0 0.0
        %332 = vmatpush1.msra.mxu0 0.0
        %333 = vmatprep.subr.mxu0 0.0
        %334 = vmatpush1.msra.mxu0 0.0
        %335 = vmatprep.subr.mxu0 0.0
        %336 = vmatpush1.msra.mxu0 0.0
        %337 = vmatprep.subr.mxu0 0.0
        %338 = vmatpush1.msra.mxu0 0.0
        %339 = vmatprep.subr.mxu0 0.0
        %340 = vmatpush1.msra.mxu0 0.0
        %341 = vmatprep.subr.mxu0 0.0
        %342 = vmatpush1.msra.mxu0 0.0
        %343 = vmatprep.subr.mxu0 0.0
        %344 = vmatpush1.msra.mxu0 0.0
        %345 = vmatprep.subr.mxu0 0.0
        %346 = vmatpush1.msra.mxu0 0.0
        %347 = vmatprep.subr.mxu0 0.0
        %348 = vmatpush1.msra.mxu0 0.0
        %349 = vmatprep.subr.mxu0 0.0
        %350 = vmatpush1.msra.mxu0 0.0
        %351 = vmatprep.subr.mxu0 0.0
        %352 = vmatpush1.msra.mxu0 0.0
        %353 = vmatprep.subr.mxu0 0.0
        %354 = vmatpush1.msra.mxu0 0.0
        %355 = vmatprep.subr.mxu0 0.0
        %356 = vmatpush1.msra.mxu0 0.0
        %357 = vmatprep.subr.mxu0 0.0
        %358 = vmatpush1.msra.mxu0 0.0
        %359 = vmatprep.subr.mxu0 0.0
        %360 = vmatpush1.msra.mxu0 0.0
        %361 = vmatprep.subr.mxu0 0.0
        %362 = vmatpush1.msra.mxu0 0.0
        %363 = vmatprep.subr.mxu0 0.0
        %364 = vmatpush1.msra.mxu0 0.0
        %365 = vmatprep.subr.mxu0 0.0
        %366 = vmatpush1.msra.mxu0 0.0
        %367 = vmatprep.subr.mxu0 0.0
        %368 = vmatpush1.msra.mxu0 0.0
        %369 = vmatprep.subr.mxu0 0.0
        %370 = vmatpush1.msra.mxu0 0.0
        %371 = vmatprep.subr.mxu0 0.0
        %372 = vmatpush1.msra.mxu0 0.0
        %373 = vmatprep.subr.mxu0 0.0
        %374 = vmatpush1.msra.mxu0 0.0
        %375 = vmatprep.subr.mxu0 0.0
        %376 = vmatpush1.msra.mxu0 0.0
        %377 = vmatprep.subr.mxu0 0.0
        %378 = vmatpush1.msra.mxu0 0.0
        %379 = vmatprep.subr.mxu0 0.0
        %380 = vmatpush1.msra.mxu0 0.0
        %381 = vmatprep.subr.mxu0 0.0
        %382 = vmatpush1.msra.mxu0 0.0
        %383 = vmatprep.subr.mxu0 0.0
        %384 = vmatpush1.msra.mxu0 0.0
        %385 = vmatprep.subr.mxu0 0.0
        %386 = vmatpush1.msra.mxu0 0.0
        %387 = vmatprep.subr.mxu0 0.0
        %388 = vmatpush1.msra.mxu0 0.0
        %389 = vmatprep.mubr.f32.mxu0 0.0
        %390 = vmatmul.mubr.f32.gmra.mrb[0].mxu0 %v320
        %v391 = vpop.f32.mrb[0].mxu0
        %v392 = vadd.f32 0.0, %v391
        %v393 = vpop.f32.mrb[0].mxu0
        %394 = vmatprep.mubr.f32.mxu0 0.0
        %395 = vmatmul.mubr.f32.gmra.mrb[0].mxu0 %v323
        %v396 = vpop.f32.mrb[0].mxu0
        %v397 = vadd.f32 0.0, %v396
        %v398 = vpop.f32.mrb[0].mxu0
        %399 = vdwg.mxu0
        %v400 = vld [vmem:[#allocation7] sm:$0xff]
        %v401 = vld [vmem:[#allocation7 + $0x8] sm:$0xff]
        %v402 = vld [vmem:[#allocation7 + $0x10] sm:$0xff]
        %v403 = vld [vmem:[#allocation7 + $0x18] sm:$0xff]
        %v404 = vld [vmem:[#allocation7 + $0x20] sm:$0xff]
        %v405 = vld [vmem:[#allocation7 + $0x28] sm:$0xff]
        %v406 = vld [vmem:[#allocation7 + $0x30] sm:$0xff]
        %v407 = vld [vmem:[#allocation7 + $0x38] sm:$0xff]
        %v408 = vld [vmem:[#allocation7 + $0x40] sm:$0xff]
        %v409 = vld [vmem:[#allocation7 + $0x48] sm:$0xff]
        %v410 = vld [vmem:[#allocation7 + $0x50] sm:$0xff]
        %v411 = vld [vmem:[#allocation7 + $0x58] sm:$0xff]
        %v412 = vld [vmem:[#allocation7 + $0x60] sm:$0xff]
        %v413 = vld [vmem:[#allocation7 + $0x68] sm:$0xff]
        %v414 = vld [vmem:[#allocation7 + $0x70] sm:$0xff]
        %v415 = vld [vmem:[#allocation7 + $0x78] sm:$0xff]
        %s416 = scalar_lea.vmem [#allocation5], 16
        %v417 = vld [vmem:[%s416] sm:$0xff]
        %v418 = vld [vmem:[%s416 + $0x8] sm:$0xff]
        %v420 = vsel %vm318, %v417, 0
        %v423 = vsel %vm318, %v418, 0
        %425 = vmatprep.subr.mxu0 0.0
        %426 = vmatpush1.msra.mxu0 %v314
        %427 = vmatprep.subr.mxu0 0.0
        %428 = vmatpush1.msra.mxu0 %v315
        %429 = vmatprep.subr.mxu0 0.0
        %430 = vmatpush1.msra.mxu0 0.0
        %431 = vmatprep.subr.mxu0 0.0
        %432 = vmatpush1.msra.mxu0 0.0
        %433 = vmatprep.subr.mxu0 0.0
        %434 = vmatpush1.msra.mxu0 0.0
        %435 = vmatprep.subr.mxu0 0.0
        %436 = vmatpush1.msra.mxu0 0.0
        %437 = vmatprep.subr.mxu0 0.0
        %438 = vmatpush1.msra.mxu0 0.0
        %439 = vmatprep.subr.mxu0 0.0
        %440 = vmatpush1.msra.mxu0 0.0
        %441 = vmatprep.subr.mxu0 0.0
        %442 = vmatpush1.msra.mxu0 0.0
        %443 = vmatprep.subr.mxu0 0.0
        %444 = vmatpush1.msra.mxu0 0.0
        %445 = vmatprep.subr.mxu0 0.0
        %446 = vmatpush1.msra.mxu0 0.0
        %447 = vmatprep.subr.mxu0 0.0
        %448 = vmatpush1.msra.mxu0 0.0
        %449 = vmatprep.subr.mxu0 0.0
        %450 = vmatpush1.msra.mxu0 0.0
        %451 = vmatprep.subr.mxu0 0.0
        %452 = vmatpush1.msra.mxu0 0.0
        %453 = vmatprep.subr.mxu0 0.0
        %454 = vmatpush1.msra.mxu0 0.0
        %455 = vmatprep.subr.mxu0 0.0
        %456 = vmatpush1.msra.mxu0 0.0
        %457 = vmatprep.subr.mxu0 0.0
        %458 = vmatpush1.msra.mxu0 0.0
        %459 = vmatprep.subr.mxu0 0.0
        %460 = vmatpush1.msra.mxu0 0.0
        %461 = vmatprep.subr.mxu0 0.0
        %462 = vmatpush1.msra.mxu0 0.0
        %463 = vmatprep.subr.mxu0 0.0
        %464 = vmatpush1.msra.mxu0 0.0
        %465 = vmatprep.subr.mxu0 0.0
        %466 = vmatpush1.msra.mxu0 0.0
        %467 = vmatprep.subr.mxu0 0.0
        %468 = vmatpush1.msra.mxu0 0.0
        %469 = vmatprep.subr.mxu0 0.0
        %470 = vmatpush1.msra.mxu0 0.0
        %471 = vmatprep.subr.mxu0 0.0
        %472 = vmatpush1.msra.mxu0 0.0
        %473 = vmatprep.subr.mxu0 0.0
        %474 = vmatpush1.msra.mxu0 0.0
        %475 = vmatprep.subr.mxu0 0.0
        %476 = vmatpush1.msra.mxu0 0.0
        %477 = vmatprep.subr.mxu0 0.0
        %478 = vmatpush1.msra.mxu0 0.0
        %479 = vmatprep.subr.mxu0 0.0
        %480 = vmatpush1.msra.mxu0 0.0
        %481 = vmatprep.subr.mxu0 0.0
        %482 = vmatpush1.msra.mxu0 0.0
        %483 = vmatprep.subr.mxu0 0.0
        %484 = vmatpush1.msra.mxu0 0.0
        %485 = vmatprep.subr.mxu0 0.0
        %486 = vmatpush1.msra.mxu0 0.0
        %487 = vmatprep.subr.mxu0 0.0
        %488 = vmatpush1.msra.mxu0 0.0
        %489 = vmatprep.mubr.f32.mxu0 0.0
        %490 = vmatmul.mubr.f32.gmra.mrb[0].mxu0 %v420
        %v491 = vpop.f32.mrb[0].mxu0
        %v492 = vadd.f32 0.0, %v491
        %v493 = vpop.f32.mrb[0].mxu0
        %494 = vmatprep.mubr.f32.mxu0 0.0
        %495 = vmatmul.mubr.f32.gmra.mrb[0].mxu0 %v423
        %v496 = vpop.f32.mrb[0].mxu0
        %v497 = vadd.f32 0.0, %v496
        %v498 = vpop.f32.mrb[0].mxu0
        %499 = vdwg.mxu0
        %s500 = scalar_lea.vmem [#allocation7], 128
        %v501 = vld [vmem:[%s500] sm:$0xff]
        %v502 = vld [vmem:[%s500 + $0x8] sm:$0xff]
        %v503 = vld [vmem:[%s500 + $0x10] sm:$0xff]
        %v504 = vld [vmem:[%s500 + $0x18] sm:$0xff]
        %v505 = vld [vmem:[%s500 + $0x20] sm:$0xff]
        %v506 = vld [vmem:[%s500 + $0x28] sm:$0xff]
        %v507 = vld [vmem:[%s500 + $0x30] sm:$0xff]
        %v508 = vld [vmem:[%s500 + $0x38] sm:$0xff]
        %v509 = vld [vmem:[%s500 + $0x40] sm:$0xff]
        %v510 = vld [vmem:[%s500 + $0x48] sm:$0xff]
        %v511 = vld [vmem:[%s500 + $0x50] sm:$0xff]
        %v512 = vld [vmem:[%s500 + $0x58] sm:$0xff]
        %v513 = vld [vmem:[%s500 + $0x60] sm:$0xff]
        %v514 = vld [vmem:[%s500 + $0x68] sm:$0xff]
        %v515 = vld [vmem:[%s500 + $0x70] sm:$0xff]
        %v516 = vld [vmem:[%s500 + $0x78] sm:$0xff]
        %517 = vmatprep.subr.mxu0 0.0
        %518 = vmatpush1.msra.mxu0 %v501
        %519 = vmatprep.subr.mxu0 0.0
        %520 = vmatpush1.msra.mxu0 %v502
        %521 = vmatprep.subr.mxu0 0.0
        %522 = vmatpush1.msra.mxu0 %v503
        %523 = vmatprep.subr.mxu0 0.0
        %524 = vmatpush1.msra.mxu0 %v504
        %525 = vmatprep.subr.mxu0 0.0
        %526 = vmatpush1.msra.mxu0 %v505
        %527 = vmatprep.subr.mxu0 0.0
        %528 = vmatpush1.msra.mxu0 %v506
        %529 = vmatprep.subr.mxu0 0.0
        %530 = vmatpush1.msra.mxu0 %v507
        %531 = vmatprep.subr.mxu0 0.0
        %532 = vmatpush1.msra.mxu0 %v508
        %533 = vmatprep.subr.mxu0 0.0
        %534 = vmatpush1.msra.mxu0 %v509
        %535 = vmatprep.subr.mxu0 0.0
        %536 = vmatpush1.msra.mxu0 %v510
        %537 = vmatprep.subr.mxu0 0.0
        %538 = vmatpush1.msra.mxu0 %v511
        %539 = vmatprep.subr.mxu0 0.0
        %540 = vmatpush1.msra.mxu0 %v512
        %541 = vmatprep.subr.mxu0 0.0
        %542 = vmatpush1.msra.mxu0 %v513
        %543 = vmatprep.subr.mxu0 0.0
        %544 = vmatpush1.msra.mxu0 %v514
        %545 = vmatprep.subr.mxu0 0.0
        %546 = vmatpush1.msra.mxu0 %v515
        %547 = vmatprep.subr.mxu0 0.0
        %548 = vmatpush1.msra.mxu0 %v516
        %549 = vmatprep.subr.mxu0 0.0
        %550 = vmatpush1.msra.mxu0 0.0
        %551 = vmatprep.subr.mxu0 0.0
        %552 = vmatpush1.msra.mxu0 0.0
        %553 = vmatprep.subr.mxu0 0.0
        %554 = vmatpush1.msra.mxu0 0.0
        %555 = vmatprep.subr.mxu0 0.0
        %556 = vmatpush1.msra.mxu0 0.0
        %557 = vmatprep.subr.mxu0 0.0
        %558 = vmatpush1.msra.mxu0 0.0
        %559 = vmatprep.subr.mxu0 0.0
        %560 = vmatpush1.msra.mxu0 0.0
        %561 = vmatprep.subr.mxu0 0.0
        %562 = vmatpush1.msra.mxu0 0.0
        %563 = vmatprep.subr.mxu0 0.0
        %564 = vmatpush1.msra.mxu0 0.0
        %565 = vmatprep.subr.mxu0 0.0
        %566 = vmatpush1.msra.mxu0 0.0
        %567 = vmatprep.subr.mxu0 0.0
        %568 = vmatpush1.msra.mxu0 0.0
        %569 = vmatprep.subr.mxu0 0.0
        %570 = vmatpush1.msra.mxu0 0.0
        %571 = vmatprep.subr.mxu0 0.0
        %572 = vmatpush1.msra.mxu0 0.0
        %573 = vmatprep.subr.mxu0 0.0
        %574 = vmatpush1.msra.mxu0 0.0
        %575 = vmatprep.subr.mxu0 0.0
        %576 = vmatpush1.msra.mxu0 0.0
        %577 = vmatprep.subr.mxu0 0.0
        %578 = vmatpush1.msra.mxu0 0.0
        %579 = vmatprep.subr.mxu0 0.0
        %580 = vmatpush1.msra.mxu0 0.0
        %581 = vmatprep.mubr.f32.mxu0 0.0
        %582 = vmatmul.mubr.f32.gmra.mrb[0].mxu0 %v492
        %v583 = vpop.f32.mrb[0].mxu0
        %v584 = vadd.f32 0.0, %v583
        %v585 = vpop.f32.mrb[0].mxu0
        %586 = vmatprep.mubr.f32.mxu0 0.0
        %587 = vmatmul.mubr.f32.gmra.mrb[0].mxu0 %v497
        %v588 = vpop.f32.mrb[0].mxu0
        %v589 = vadd.f32 0.0, %v588
        %v590 = vpop.f32.mrb[0].mxu0
        %591 = vdwg.mxu0
        %592 = vmatprep.subr.mxu0 0.0
        %593 = vmatpush1.msra.mxu0 %v400
        %594 = vmatprep.subr.mxu0 0.0
        %595 = vmatpush1.msra.mxu0 %v401
        %596 = vmatprep.subr.mxu0 0.0
        %597 = vmatpush1.msra.mxu0 %v402
        %598 = vmatprep.subr.mxu0 0.0
        %599 = vmatpush1.msra.mxu0 %v403
        %600 = vmatprep.subr.mxu0 0.0
        %601 = vmatpush1.msra.mxu0 %v404
        %602 = vmatprep.subr.mxu0 0.0
        %603 = vmatpush1.msra.mxu0 %v405
        %604 = vmatprep.subr.mxu0 0.0
        %605 = vmatpush1.msra.mxu0 %v406
        %606 = vmatprep.subr.mxu0 0.0
        %607 = vmatpush1.msra.mxu0 %v407
        %608 = vmatprep.subr.mxu0 0.0
        %609 = vmatpush1.msra.mxu0 %v408
        %610 = vmatprep.subr.mxu0 0.0
        %611 = vmatpush1.msra.mxu0 %v409
        %612 = vmatprep.subr.mxu0 0.0
        %613 = vmatpush1.msra.mxu0 %v410
        %614 = vmatprep.subr.mxu0 0.0
        %615 = vmatpush1.msra.mxu0 %v411
        %616 = vmatprep.subr.mxu0 0.0
        %617 = vmatpush1.msra.mxu0 %v412
        %618 = vmatprep.subr.mxu0 0.0
        %619 = vmatpush1.msra.mxu0 %v413
        %620 = vmatprep.subr.mxu0 0.0
        %621 = vmatpush1.msra.mxu0 %v414
        %622 = vmatprep.subr.mxu0 0.0
        %623 = vmatpush1.msra.mxu0 %v415
        %624 = vmatprep.subr.mxu0 0.0
        %625 = vmatpush1.msra.mxu0 0.0
        %626 = vmatprep.subr.mxu0 0.0
        %627 = vmatpush1.msra.mxu0 0.0
        %628 = vmatprep.subr.mxu0 0.0
        %629 = vmatpush1.msra.mxu0 0.0
        %630 = vmatprep.subr.mxu0 0.0
        %631 = vmatpush1.msra.mxu0 0.0
        %632 = vmatprep.subr.mxu0 0.0
        %633 = vmatpush1.msra.mxu0 0.0
        %634 = vmatprep.subr.mxu0 0.0
        %635 = vmatpush1.msra.mxu0 0.0
        %636 = vmatprep.subr.mxu0 0.0
        %637 = vmatpush1.msra.mxu0 0.0
        %638 = vmatprep.subr.mxu0 0.0
        %639 = vmatpush1.msra.mxu0 0.0
        %640 = vmatprep.subr.mxu0 0.0
        %641 = vmatpush1.msra.mxu0 0.0
        %642 = vmatprep.subr.mxu0 0.0
        %643 = vmatpush1.msra.mxu0 0.0
        %644 = vmatprep.subr.mxu0 0.0
        %645 = vmatpush1.msra.mxu0 0.0
        %646 = vmatprep.subr.mxu0 0.0
        %647 = vmatpush1.msra.mxu0 0.0
        %648 = vmatprep.subr.mxu0 0.0
        %649 = vmatpush1.msra.mxu0 0.0
        %650 = vmatprep.subr.mxu0 0.0
        %651 = vmatpush1.msra.mxu0 0.0
        %652 = vmatprep.subr.mxu0 0.0
        %653 = vmatpush1.msra.mxu0 0.0
        %654 = vmatprep.subr.mxu0 0.0
        %655 = vmatpush1.msra.mxu0 0.0
        %656 = vmatprep.mubr.f32.mxu0 0.0
        %657 = vmatmul.mubr.f32.gmra.mrb[0].mxu0 %v392
        %v658 = vpop.f32.mrb[0].mxu0
        %v659 = vadd.f32 %v584, %v658
        %v660 = vpop.f32.mrb[0].mxu0
        %661 = vmatprep.mubr.f32.mxu0 0.0
        %662 = vmatmul.mubr.f32.gmra.mrb[0].mxu0 %v397
        %v663 = vpop.f32.mrb[0].mxu0
        %v664 = vadd.f32 %v589, %v663
        %v665 = vpop.f32.mrb[0].mxu0
        %666 = vdwg.mxu0
        %s667 = scalar_lea.vmem [#allocation5], 32
        %v668 = vld [vmem:[%s667] sm:$0xff]
        %v669 = vld [vmem:[%s667 + $0x8] sm:$0xff]
        %v671 = vsel %vm318, %v668, 0
        %v674 = vsel %vm318, %v669, 0
        %676 = vmatprep.subr.mxu0 0.0
        %677 = vmatpush1.msra.mxu0 %v314
        %678 = vmatprep.subr.mxu0 0.0
        %679 = vmatpush1.msra.mxu0 %v315
        %680 = vmatprep.subr.mxu0 0.0
        %681 = vmatpush1.msra.mxu0 0.0
        %682 = vmatprep.subr.mxu0 0.0
        %683 = vmatpush1.msra.mxu0 0.0
        %684 = vmatprep.subr.mxu0 0.0
        %685 = vmatpush1.msra.mxu0 0.0
        %686 = vmatprep.subr.mxu0 0.0
        %687 = vmatpush1.msra.mxu0 0.0
        %688 = vmatprep.subr.mxu0 0.0
        %689 = vmatpush1.msra.mxu0 0.0
        %690 = vmatprep.subr.mxu0 0.0
        %691 = vmatpush1.msra.mxu0 0.0
        %692 = vmatprep.subr.mxu0 0.0
        %693 = vmatpush1.msra.mxu0 0.0
        %694 = vmatprep.subr.mxu0 0.0
        %695 = vmatpush1.msra.mxu0 0.0
        %696 = vmatprep.subr.mxu0 0.0
        %697 = vmatpush1.msra.mxu0 0.0
        %698 = vmatprep.subr.mxu0 0.0
        %699 = vmatpush1.msra.mxu0 0.0
        %700 = vmatprep.subr.mxu0 0.0
        %701 = vmatpush1.msra.mxu0 0.0
        %702 = vmatprep.subr.mxu0 0.0
        %703 = vmatpush1.msra.mxu0 0.0
        %704 = vmatprep.subr.mxu0 0.0
        %705 = vmatpush1.msra.mxu0 0.0
        %706 = vmatprep.subr.mxu0 0.0
        %707 = vmatpush1.msra.mxu0 0.0
        %708 = vmatprep.subr.mxu0 0.0
        %709 = vmatpush1.msra.mxu0 0.0
        %710 = vmatprep.subr.mxu0 0.0
        %711 = vmatpush1.msra.mxu0 0.0
        %712 = vmatprep.subr.mxu0 0.0
        %713 = vmatpush1.msra.mxu0 0.0
        %714 = vmatprep.subr.mxu0 0.0
        %715 = vmatpush1.msra.mxu0 0.0
        %716 = vmatprep.subr.mxu0 0.0
        %717 = vmatpush1.msra.mxu0 0.0
        %718 = vmatprep.subr.mxu0 0.0
        %719 = vmatpush1.msra.mxu0 0.0
        %720 = vmatprep.subr.mxu0 0.0
        %721 = vmatpush1.msra.mxu0 0.0
        %722 = vmatprep.subr.mxu0 0.0
        %723 = vmatpush1.msra.mxu0 0.0
        %724 = vmatprep.subr.mxu0 0.0
        %725 = vmatpush1.msra.mxu0 0.0
        %726 = vmatprep.subr.mxu0 0.0
        %727 = vmatpush1.msra.mxu0 0.0
        %728 = vmatprep.subr.mxu0 0.0
        %729 = vmatpush1.msra.mxu0 0.0
        %730 = vmatprep.subr.mxu0 0.0
        %731 = vmatpush1.msra.mxu0 0.0
        %732 = vmatprep.subr.mxu0 0.0
        %733 = vmatpush1.msra.mxu0 0.0
        %734 = vmatprep.subr.mxu0 0.0
        %735 = vmatpush1.msra.mxu0 0.0
        %736 = vmatprep.subr.mxu0 0.0
        %737 = vmatpush1.msra.mxu0 0.0
        %738 = vmatprep.subr.mxu0 0.0
        %739 = vmatpush1.msra.mxu0 0.0
        %740 = vmatprep.mubr.f32.mxu0 0.0
        %741 = vmatmul.mubr.f32.gmra.mrb[0].mxu0 %v671
        %v742 = vpop.f32.mrb[0].mxu0
        %v743 = vadd.f32 0.0, %v742
        %v744 = vpop.f32.mrb[0].mxu0
        %745 = vmatprep.mubr.f32.mxu0 0.0
        %746 = vmatmul.mubr.f32.gmra.mrb[0].mxu0 %v674
        %v747 = vpop.f32.mrb[0].mxu0
        %v748 = vadd.f32 0.0, %v747
        %v749 = vpop.f32.mrb[0].mxu0
        %750 = vdwg.mxu0
        %s751 = scalar_lea.vmem [#allocation7], 256
        %v752 = vld [vmem:[%s751] sm:$0xff]
        %v753 = vld [vmem:[%s751 + $0x8] sm:$0xff]
        %v754 = vld [vmem:[%s751 + $0x10] sm:$0xff]
        %v755 = vld [vmem:[%s751 + $0x18] sm:$0xff]
        %v756 = vld [vmem:[%s751 + $0x20] sm:$0xff]
        %v757 = vld [vmem:[%s751 + $0x28] sm:$0xff]
        %v758 = vld [vmem:[%s751 + $0x30] sm:$0xff]
        %v759 = vld [vmem:[%s751 + $0x38] sm:$0xff]
        %v760 = vld [vmem:[%s751 + $0x40] sm:$0xff]
        %v761 = vld [vmem:[%s751 + $0x48] sm:$0xff]
        %v762 = vld [vmem:[%s751 + $0x50] sm:$0xff]
        %v763 = vld [vmem:[%s751 + $0x58] sm:$0xff]
        %v764 = vld [vmem:[%s751 + $0x60] sm:$0xff]
        %v765 = vld [vmem:[%s751 + $0x68] sm:$0xff]
        %v766 = vld [vmem:[%s751 + $0x70] sm:$0xff]
        %v767 = vld [vmem:[%s751 + $0x78] sm:$0xff]
        %768 = vmatprep.subr.mxu0 0.0
        %769 = vmatpush1.msra.mxu0 %v752
        %770 = vmatprep.subr.mxu0 0.0
        %771 = vmatpush1.msra.mxu0 %v753
        %772 = vmatprep.subr.mxu0 0.0
        %773 = vmatpush1.msra.mxu0 %v754
        %774 = vmatprep.subr.mxu0 0.0
        %775 = vmatpush1.msra.mxu0 %v755
        %776 = vmatprep.subr.mxu0 0.0
        %777 = vmatpush1.msra.mxu0 %v756
        %778 = vmatprep.subr.mxu0 0.0
        %779 = vmatpush1.msra.mxu0 %v757
        %780 = vmatprep.subr.mxu0 0.0
        %781 = vmatpush1.msra.mxu0 %v758
        %782 = vmatprep.subr.mxu0 0.0
        %783 = vmatpush1.msra.mxu0 %v759
        %784 = vmatprep.subr.mxu0 0.0
        %785 = vmatpush1.msra.mxu0 %v760
        %786 = vmatprep.subr.mxu0 0.0
        %787 = vmatpush1.msra.mxu0 %v761
        %788 = vmatprep.subr.mxu0 0.0
        %789 = vmatpush1.msra.mxu0 %v762
        %790 = vmatprep.subr.mxu0 0.0
        %791 = vmatpush1.msra.mxu0 %v763
        %792 = vmatprep.subr.mxu0 0.0
        %793 = vmatpush1.msra.mxu0 %v764
        %794 = vmatprep.subr.mxu0 0.0
        %795 = vmatpush1.msra.mxu0 %v765
        %796 = vmatprep.subr.mxu0 0.0
        %797 = vmatpush1.msra.mxu0 %v766
        %798 = vmatprep.subr.mxu0 0.0
        %799 = vmatpush1.msra.mxu0 %v767
        %800 = vmatprep.subr.mxu0 0.0
        %801 = vmatpush1.msra.mxu0 0.0
        %802 = vmatprep.subr.mxu0 0.0
        %803 = vmatpush1.msra.mxu0 0.0
        %804 = vmatprep.subr.mxu0 0.0
        %805 = vmatpush1.msra.mxu0 0.0
        %806 = vmatprep.subr.mxu0 0.0
        %807 = vmatpush1.msra.mxu0 0.0
        %808 = vmatprep.subr.mxu0 0.0
        %809 = vmatpush1.msra.mxu0 0.0
        %810 = vmatprep.subr.mxu0 0.0
        %811 = vmatpush1.msra.mxu0 0.0
        %812 = vmatprep.subr.mxu0 0.0
        %813 = vmatpush1.msra.mxu0 0.0
        %814 = vmatprep.subr.mxu0 0.0
        %815 = vmatpush1.msra.mxu0 0.0
        %816 = vmatprep.subr.mxu0 0.0
        %817 = vmatpush1.msra.mxu0 0.0
        %818 = vmatprep.subr.mxu0 0.0
        %819 = vmatpush1.msra.mxu0 0.0
        %820 = vmatprep.subr.mxu0 0.0
        %821 = vmatpush1.msra.mxu0 0.0
        %822 = vmatprep.subr.mxu0 0.0
        %823 = vmatpush1.msra.mxu0 0.0
        %824 = vmatprep.subr.mxu0 0.0
        %825 = vmatpush1.msra.mxu0 0.0
        %826 = vmatprep.subr.mxu0 0.0
        %827 = vmatpush1.msra.mxu0 0.0
        %828 = vmatprep.subr.mxu0 0.0
        %829 = vmatpush1.msra.mxu0 0.0
        %830 = vmatprep.subr.mxu0 0.0
        %831 = vmatpush1.msra.mxu0 0.0
        %832 = vmatprep.mubr.f32.mxu0 0.0
        %833 = vmatmul.mubr.f32.gmra.mrb[0].mxu0 %v743
        %v834 = vpop.f32.mrb[0].mxu0
        %v835 = vadd.f32 0.0, %v834
        %v836 = vpop.f32.mrb[0].mxu0
        %837 = vmatprep.mubr.f32.mxu0 0.0
        %838 = vmatmul.mubr.f32.gmra.mrb[0].mxu0 %v748
        %v839 = vpop.f32.mrb[0].mxu0
        %v840 = vadd.f32 0.0, %v839
        %v841 = vpop.f32.mrb[0].mxu0
        %842 = vdwg.mxu0
        %v843 = vadd.f32 %v659, %v835
        %v844 = vadd.f32 %v664, %v840
        %v845 = vld [vmem:[%s3] sm:$0x1]
        %v847 = vlaneseq
        %v848 = vshrl.u32 %v847, 7
        %v849 = vsub.s32 0, %v848
        %v850 = vrot.slane %v845, %v849
        %v852 = vadd.f32 %v843, %v850
        %v853 = vadd.f32 %v844, %v850
        %v854 = vmax.f32 %v852, 0.0
        %v855 = vmax.f32 %v853, 0.0
        %v856 = vld [vmem:[#allocation8] sm:$0xff]
        %v857 = vld [vmem:[#allocation8 + $0x8] sm:$0xff]
        %v858 = vld [vmem:[#allocation8 + $0x10] sm:$0xff]
        %v859 = vld [vmem:[#allocation8 + $0x18] sm:$0xff]
        %v860 = vld [vmem:[#allocation8 + $0x20] sm:$0xff]
        %v861 = vld [vmem:[#allocation8 + $0x28] sm:$0xff]
        %v862 = vld [vmem:[#allocation8 + $0x30] sm:$0xff]
        %v863 = vld [vmem:[#allocation8 + $0x38] sm:$0xff]
        %v864 = vld [vmem:[#allocation8 + $0x40] sm:$0xff]
        %v865 = vld [vmem:[#allocation8 + $0x48] sm:$0xff]
        %v866 = vld [vmem:[#allocation8 + $0x50] sm:$0xff]
        %v867 = vld [vmem:[#allocation8 + $0x58] sm:$0xff]
        %v868 = vld [vmem:[#allocation8 + $0x60] sm:$0xff]
        %v869 = vld [vmem:[#allocation8 + $0x68] sm:$0xff]
        %v870 = vld [vmem:[#allocation8 + $0x70] sm:$0xff]
        %v871 = vld [vmem:[#allocation8 + $0x78] sm:$0xff]
        %v872 = vld [vmem:[#allocation8 + $0x80] sm:$0xff]
        %v873 = vld [vmem:[#allocation8 + $0x88] sm:$0xff]
        %v874 = vld [vmem:[#allocation8 + $0x90] sm:$0xff]
        %v875 = vld [vmem:[#allocation8 + $0x98] sm:$0xff]
        %v876 = vld [vmem:[#allocation8 + $0xa0] sm:$0xff]
        %v877 = vld [vmem:[#allocation8 + $0xa8] sm:$0xff]
        %v878 = vld [vmem:[#allocation8 + $0xb0] sm:$0xff]
        %v879 = vld [vmem:[#allocation8 + $0xb8] sm:$0xff]
        %v880 = vld [vmem:[#allocation8 + $0xc0] sm:$0xff]
        %v881 = vld [vmem:[#allocation8 + $0xc8] sm:$0xff]
        %v882 = vld [vmem:[#allocation8 + $0xd0] sm:$0xff]
        %v883 = vld [vmem:[#allocation8 + $0xd8] sm:$0xff]
        %v884 = vld [vmem:[#allocation8 + $0xe0] sm:$0xff]
        %v885 = vld [vmem:[#allocation8 + $0xe8] sm:$0xff]
        %v886 = vld [vmem:[#allocation8 + $0xf0] sm:$0xff]
        %v887 = vld [vmem:[#allocation8 + $0xf8] sm:$0xff]
        %v888 = vld [vmem:[%s5] sm:$0x3]
        %v890 = vlaneseq
        %v891 = vshrl.u32 %v890, 7
        %v892 = vsub.s32 0, %v891
        %v893 = vrot.slane %v888, %v892
        %v894 = vlaneseq
        %v895 = vshrl.u32 %v894, 7
        %v896 = vsub.s32 1, %v895
        %v897 = vrot.slane %v888, %v896
        %900 = vmatprep.subr.mxu0 %v857
        %901 = vmatpush1.msra.mxu0 %v856
        %902 = vmatprep.subr.mxu0 %v859
        %903 = vmatpush1.msra.mxu0 %v858
        %904 = vmatprep.subr.mxu0 %v861
        %905 = vmatpush1.msra.mxu0 %v860
        %906 = vmatprep.subr.mxu0 %v863
        %907 = vmatpush1.msra.mxu0 %v862
        %908 = vmatprep.subr.mxu0 %v865
        %909 = vmatpush1.msra.mxu0 %v864
        %910 = vmatprep.subr.mxu0 %v867
        %911 = vmatpush1.msra.mxu0 %v866
        %912 = vmatprep.subr.mxu0 %v869
        %913 = vmatpush1.msra.mxu0 %v868
        %914 = vmatprep.subr.mxu0 %v871
        %915 = vmatpush1.msra.mxu0 %v870
        %916 = vmatprep.subr.mxu0 %v873
        %917 = vmatpush1.msra.mxu0 %v872
        %918 = vmatprep.subr.mxu0 %v875
        %919 = vmatpush1.msra.mxu0 %v874
        %920 = vmatprep.subr.mxu0 %v877
        %921 = vmatpush1.msra.mxu0 %v876
        %922 = vmatprep.subr.mxu0 %v879
        %923 = vmatpush1.msra.mxu0 %v878
        %924 = vmatprep.subr.mxu0 %v881
        %925 = vmatpush1.msra.mxu0 %v880
        %926 = vmatprep.subr.mxu0 %v883
        %927 = vmatpush1.msra.mxu0 %v882
        %928 = vmatprep.subr.mxu0 %v885
        %929 = vmatpush1.msra.mxu0 %v884
        %930 = vmatprep.subr.mxu0 %v887
        %931 = vmatpush1.msra.mxu0 %v886
        %932 = vmatprep.subr.mxu0 0.0
        %933 = vmatpush1.msra.mxu0 0.0
        %934 = vmatprep.subr.mxu0 0.0
        %935 = vmatpush1.msra.mxu0 0.0
        %936 = vmatprep.subr.mxu0 0.0
        %937 = vmatpush1.msra.mxu0 0.0
        %938 = vmatprep.subr.mxu0 0.0
        %939 = vmatpush1.msra.mxu0 0.0
        %940 = vmatprep.subr.mxu0 0.0
        %941 = vmatpush1.msra.mxu0 0.0
        %942 = vmatprep.subr.mxu0 0.0
        %943 = vmatpush1.msra.mxu0 0.0
        %944 = vmatprep.subr.mxu0 0.0
        %945 = vmatpush1.msra.mxu0 0.0
        %946 = vmatprep.subr.mxu0 0.0
        %947 = vmatpush1.msra.mxu0 0.0
        %948 = vmatprep.subr.mxu0 0.0
        %949 = vmatpush1.msra.mxu0 0.0
        %950 = vmatprep.subr.mxu0 0.0
        %951 = vmatpush1.msra.mxu0 0.0
        %952 = vmatprep.subr.mxu0 0.0
        %953 = vmatpush1.msra.mxu0 0.0
        %954 = vmatprep.subr.mxu0 0.0
        %955 = vmatpush1.msra.mxu0 0.0
        %956 = vmatprep.subr.mxu0 0.0
        %957 = vmatpush1.msra.mxu0 0.0
        %958 = vmatprep.subr.mxu0 0.0
        %959 = vmatpush1.msra.mxu0 0.0
        %960 = vmatprep.subr.mxu0 0.0
        %961 = vmatpush1.msra.mxu0 0.0
        %962 = vmatprep.subr.mxu0 0.0
        %963 = vmatpush1.msra.mxu0 0.0
        %964 = vmatprep.mubr.f32.mxu0 0.0
        %965 = vmatmul.mubr.f32.gmra.mrb[0].mxu0 %v854
        %v966 = vpop.f32.mrb[0].mxu0
        %v967 = vadd.f32 %v893, %v966
        %v968 = vpop.f32.mrb[0].mxu0
        %v969 = vadd.f32 %v897, %v968
        %970 = vmatprep.mubr.f32.mxu0 0.0
        %971 = vmatmul.mubr.f32.gmra.mrb[0].mxu0 %v855
        %v972 = vpop.f32.mrb[0].mxu0
        %v973 = vadd.f32 %v893, %v972
        %v974 = vpop.f32.mrb[0].mxu0
        %v975 = vadd.f32 %v897, %v974
        %976 = vdwg.mxu0
        %v977 = vmax.f32 %v967, 0.0
        %v978 = vmax.f32 %v969, 0.0
        %v979 = vmax.f32 %v973, 0.0
        %v980 = vmax.f32 %v975, 0.0
        %981 = vst [vmem:[%s313] sm:$0xff] %v977
        %982 = vst [vmem:[%s313 + $0x8] sm:$0xff] %v978
        %983 = vst [vmem:[%s313 + $0x10] sm:$0xff] %v979
        %984 = vst [vmem:[%s313 + $0x18] sm:$0xff] %v980
        %s985 = sand.u32 %s164, 1
        %s986 = scalar_lea.sflag [#allocation4], %s985
        %s987 = sand.u32 %s164, 1
        %s988 = smul.addr %s987, 32
        %s989 = scalar_lea.vmem [#allocation10], %s988
        // Predicated region
        $region61: #{tpu_custom_call.1} parent=43 // pred_check
          %p990 = pneg %p174
        $region62: #{tpu_custom_call.1} parent=43 // pred_check_branch
          %992 = sbr.rel (%p990) target = $region64
        $region63: #{tpu_custom_call.1} parent=43 // pred_region
          %s994 = ssub.s32 512, 512
          %995 = vsyncadd %s986, %s994
          %s996 = smul.addr %s25, 4
          %s997 = smul.addr %s996, 128
          %s998 = scalar_lea.hbm %s6, %s997
          %s999 = sshll.u32 %s989, 4
          %s1000 = int_to_ptr.vmem [resolvable:$true] %s999
          %1005 = dma.vmem_to_hbm [thread:$0]  %s1000, 512, %s998, %s986, 256, 256, 16
        $region64: #{tpu_custom_call.1} parent=43 // pred_fallthru
          _
      $region44: #{tpu_custom_call.1} parent=5 // pred_fallthru
        _
      %p1006 = scmp.le.s32.totalorder 2, %s20
      // Predicated region
      $region65: #{tpu_custom_call.1} parent=5 // pred_check
        %p1007 = pneg %p1006
      $region66: #{tpu_custom_call.1} parent=5 // pred_check_branch
        %1009 = sbr.rel (%p1007) target = $region68
      $region67: #{tpu_custom_call.1} parent=5 // pred_region
        %s1010 = ssub.s32 %s20, 2
        // Predicated region
        $region69: #{tpu_custom_call.1} parent=67 // pred_check
          %p1011 = pneg %p180
        $region70: #{tpu_custom_call.1} parent=67 // pred_check_branch
          %1013 = sbr.rel (%p1011) target = $region72
        $region71: #{tpu_custom_call.1} parent=67 // pred_region
          %s1014 = sand.u32 %s165, 1
          %s1015 = scalar_lea.sflag [#allocation4], %s1014
          %s1016 = sand.u32 %s165, 1
          %s1017 = smul.addr %s1016, 32
          %s1018 = scalar_lea.vmem [#allocation10], %s1017
          %1019 = dma.done %s1015, 512
        $region72: #{tpu_custom_call.1} parent=67 // pred_fallthru
          _
      $region68: #{tpu_custom_call.1} parent=5 // pred_fallthru
        _
    $region6: #{tpu_custom_call.1} parent=1 // loop_footer
      %s24 = sadd.s32 1, %s20
    $region7: #{tpu_custom_call.1} parent=1 // loop_footer_branch
      %19 = sbr.rel target = $region3
    $region8: #{tpu_custom_call.1} parent=1 // loop_exit
      _
    %1020 = vsyncpa [#allocation3], 1
    %s1021 = scalar_lea.sflag [#allocation3], 1
    %1022 = vsyncpa %s1021, 1
    %1023 = vsyncpa [#allocation6], 1
    %1024 = vsyncpa [#allocation9], 1
    %1025 = vsyncpa [#allocation4], 1
    %s1026 = scalar_lea.sflag [#allocation4], 1
    %1027 = vsyncpa %s1026, 1

</llo_original>
